<compile_context>
chip_gen: v5e
topology: v5e:2x2
jax: 0.10.0
libtpu: 0.0.40
codegen_flags: <defaults>
</compile_context>

<pallas_src>
import jax
import jax.numpy as jnp
from jax.experimental import pallas as pl
from jax.experimental.pallas import tpu as pltpu


OUT_PAD = 128  # lane-dense combined head output: col 0 = cls, cols 1:5 = reg


def _round_up(x, m):
    return (x + m - 1) // m * m


def _gelu_tanh(v):
    # tanh-approximate GELU (runs on the EUP slot; v is f32)
    c0 = jnp.float32(0.7978845608028654)  # sqrt(2/pi)
    c1 = jnp.float32(0.044715)
    return 0.5 * v * (1.0 + jnp.tanh(c0 * (v + c1 * v * v * v)))


def _gelu_erf(v):
    # exact (erf) GELU, matching torch.nn.GELU() default -- used by the reference
    return 0.5 * v * (1.0 + jax.lax.erf(v * jnp.float32(0.7071067811865476)))


# ---------------------------------------------------------------------------
# Kernels
# ---------------------------------------------------------------------------

def mlp_head_kernel_fused(x_ref, w1_ref, b1_ref, w2_ref, b2_ref, w3_ref, b3_ref,
                          out_ref):
    """Layer-2 fused block-diagonally: one (2c, 2c) matmul (256-wide MXU chips)."""
    x = x_ref[...].astype(jnp.bfloat16)                       # cast in-kernel

    # layer 1 (cls|reg fused): (tile, c) @ (c, 2c), f32 accumulate
    hg = jnp.dot(x, w1_ref[...], preferred_element_type=jnp.float32) + b1_ref[...]
    hg = _gelu_tanh(hg)

    # layer 2 (block-diag fused): (tile, 2c) @ (2c, 2c)
    hg2 = jnp.dot(hg.astype(jnp.bfloat16), w2_ref[...],
                  preferred_element_type=jnp.float32) + b2_ref[...]
    hg2 = _gelu_tanh(hg2)

    # layer 3 (fused heads): (tile, 2c) @ (2c, 128) -> lane-dense slab
    y = jnp.dot(hg2.astype(jnp.bfloat16), w3_ref[...],
                preferred_element_type=jnp.float32) + b3_ref[...]
    out_ref[...] = jax.nn.sigmoid(y).astype(out_ref.dtype)


def mlp_head_kernel_split(x_ref, w1_ref, b1_ref, cw2_ref, cb2_ref, rw2_ref, rb2_ref,
                          w3_ref, b3_ref, out_ref):
    """Layer-2 kept per-branch as two (c, c) matmuls (128-wide MXU chips)."""
    c_pad = cw2_ref.shape[0]
    x = x_ref[...].astype(jnp.bfloat16)                       # cast in-kernel

    hg = jnp.dot(x, w1_ref[...], preferred_element_type=jnp.float32) + b1_ref[...]
    hg = _gelu_tanh(hg)

    h = hg[:, :c_pad].astype(jnp.bfloat16)
    g = hg[:, c_pad:].astype(jnp.bfloat16)
    h2 = _gelu_tanh(jnp.dot(h, cw2_ref[...],
                            preferred_element_type=jnp.float32) + cb2_ref[...])
    g2 = _gelu_tanh(jnp.dot(g, rw2_ref[...],
                            preferred_element_type=jnp.float32) + rb2_ref[...])

    hg2 = jnp.concatenate([h2, g2], axis=-1).astype(jnp.bfloat16)
    y = jnp.dot(hg2, w3_ref[...], preferred_element_type=jnp.float32) + b3_ref[...]
    out_ref[...] = jax.nn.sigmoid(y).astype(out_ref.dtype)


# ---------------------------------------------------------------------------
# Parameter packing (runs once, at make_mlp_head time)
# ---------------------------------------------------------------------------

def pack_params(params, c_pad, fuse_l2, w_dtype=jnp.bfloat16, out_pad=OUT_PAD):
    """Zero-pad to 128-lane-aligned shapes, fuse cls/reg layers, cast matmul
    weights to bf16 (biases stay f32)."""
    (cw1, cb1, cw2, cb2, cw3, cb3,
     rw1, rb1, rw2, rb2, rw3, rb3) = params

    def pad2(a, r, c):
        a = a.astype(jnp.float32)
        return jnp.pad(a, ((0, r - a.shape[0]), (0, c - a.shape[1])))

    # layer 1: one (c_pad, 2*c_pad) weight -> columns [cls | reg]
    w1 = jnp.concatenate([pad2(cw1, c_pad, c_pad), pad2(rw1, c_pad, c_pad)], axis=1)
    b1 = jnp.concatenate([pad2(cb1, 1, c_pad), pad2(rb1, 1, c_pad)], axis=1)

    # layer 2
    w2c, b2c = pad2(cw2, c_pad, c_pad), pad2(cb2, 1, c_pad)
    w2r, b2r = pad2(rw2, c_pad, c_pad), pad2(rb2, 1, c_pad)

    # layer 3: one (2*c_pad, out_pad) weight; col 0 = cls head, cols 1:5 = reg head
    top = jnp.concatenate([pad2(cw3, c_pad, 1), jnp.zeros((c_pad, 4), jnp.float32)], axis=1)
    bot = jnp.concatenate([jnp.zeros((c_pad, 1), jnp.float32), pad2(rw3, c_pad, 4)], axis=1)
    w3 = jnp.pad(jnp.concatenate([top, bot], axis=0), ((0, 0), (0, out_pad - 5)))
    b3 = jnp.pad(jnp.concatenate([cb3.astype(jnp.float32), rb3.astype(jnp.float32)], axis=1),
                 ((0, 0), (0, out_pad - 5)))

    if fuse_l2:
        zero = jnp.zeros((c_pad, c_pad), jnp.float32)
        w2 = jnp.concatenate([jnp.concatenate([w2c, zero], axis=1),
                              jnp.concatenate([zero, w2r], axis=1)], axis=0)
        b2 = jnp.concatenate([b2c, b2r], axis=1)
        return (w1.astype(w_dtype), b1, w2.astype(w_dtype), b2,
                w3.astype(w_dtype), b3)
    return (w1.astype(w_dtype), b1, w2c.astype(w_dtype), b2c,
            w2r.astype(w_dtype), b2r, w3.astype(w_dtype), b3)


# ---------------------------------------------------------------------------
# Generation-aware knobs
# ---------------------------------------------------------------------------

def _vmem_ceiling_bytes():
    """~56 MiB on v7x (64 MiB physical), ~100 MiB on v5e/v6e (128 MiB)."""
    phys = 64 * 1024 * 1024  # conservative default: assume smallest (v7x) VMEM
    try:
        phys = int(getattr(pltpu.get_tpu_info(), "vmem_capacity_bytes", phys))
    except Exception:
        pass  # best-effort hardware query; keep conservative default
    return min(phys - 8 * 1024 * 1024, 100 * 1024 * 1024)


def _has_128_wide_mxu():
    """True on v2-v5 chips (128-wide MXUs) -> keep per-branch layer-2 matmuls."""
    try:
        kind = jax.devices()[0].device_kind.lower()
    except Exception:
        return False
    return any(v in kind for v in ("v2", "v3", "v4", "v5"))


def _vmem_need_bytes(tile, c_pad, weight_bytes):
    x_io = 2 * tile * c_pad * 4        # double-buffered f32 input tile
    out_io = 2 * tile * OUT_PAD * 2    # double-buffered bf16 output tile
    act = 32 * tile * c_pad            # f32 hg/hg2 + bf16 copies + y headroom
    return 2 * weight_bytes + x_io + out_io + act


# ---------------------------------------------------------------------------
# Forward factory
# ---------------------------------------------------------------------------

def make_mlp_head(params, dim, *, tile_t=None, fuse_l2=None, out_dtype=jnp.bfloat16):
    """Pack weights once and return a jitted forward(x, H, W) closure."""
    c_pad = _round_up(dim, 128)
    if fuse_l2 is None:
        fuse_l2 = (c_pad <= 256) and not _has_128_wide_mxu()
    if tile_t is None:
        # adaptive: keep enough MXU work per grid step to amortize ~0.35us overhead
        tile_t = 2048 if c_pad <= 256 else (1024 if c_pad <= 512 else 512)

    packed = pack_params(params, c_pad, fuse_l2)
    weight_bytes = sum(int(a.size) * a.dtype.itemsize for a in packed)
    ceiling = _vmem_ceiling_bytes()
    kernel = mlp_head_kernel_fused if fuse_l2 else mlp_head_kernel_split

    def forward(x, H, W):
        N, L, C = x.shape
        assert L == H * W and C == dim
        T = N * L

        x_flat = x.reshape(T, C)                       # free reshape, native f32
        if C != c_pad:                                 # lane pad only if needed
            x_flat = jnp.pad(x_flat, ((0, 0), (0, c_pad - C)))

        # Token tile: large, multiple of 16 (bf16 sublane packing), capped so the
        # grid has >= 2 steps (v7x megacore), shrunk if VMEM estimate exceeds ceiling.
        tile = min(_round_up(tile_t, 16), _round_up(T, 16))
        if T > 16:
            tile = min(tile, _round_up(-(-T // 2), 16))
        while tile > 256 and _vmem_need_bytes(tile, c_pad, weight_bytes) > ceiling:
            tile = max(256, tile // 2)
        grid = (-(-T // tile),)

        cp_kwargs = dict(dimension_semantics=("parallel",))
        need = _vmem_need_bytes(tile, c_pad, weight_bytes)
        if need > 32 * 1024 * 1024:
            cp_kwargs["vmem_limit_bytes"] = int(min(need, ceiling))

        tok = lambda i: (i, 0)
        const = lambda i: (0, 0)

        out = pl.pallas_call(
            kernel,
            out_shape=jax.ShapeDtypeStruct((T, OUT_PAD), out_dtype),
            grid=grid,
            in_specs=[pl.BlockSpec((tile, c_pad), tok)]
                     + [pl.BlockSpec(a.shape, const) for a in packed],
            out_specs=pl.BlockSpec((tile, OUT_PAD), tok),
            compiler_params=pltpu.CompilerParams(**cp_kwargs),
        )(x_flat, *packed)

        cls = out[:, 0:1].astype(jnp.float32)          # (T, 1)
        reg = out[:, 1:5].astype(jnp.float32)          # (T, 4)
        # view(N,H,W,1).permute(0,3,1,2) -> NCHW; sigmoid already applied in-kernel
        class_score = cls.reshape(N, H, W, 1).transpose(0, 3, 1, 2)
        bbox = reg.reshape(N, H, W, 4)
        return {"class_score": class_score, "bbox": bbox}

    return jax.jit(forward, static_argnums=(1, 2))


# ---------------------------------------------------------------------------
# Init + pure-JAX reference
# ---------------------------------------------------------------------------

def init_params(key, dim):
    """Deterministic init mirroring MlpHead.reset_parameters:
    trunc_normal(std=0.02, truncated at +/-2 std) for Linear weights, zero bias."""
    def trunc(k, shape, std=0.02):
        return jax.random.truncated_normal(k, -2.0, 2.0, shape, jnp.float32) * std

    ks = jax.random.split(key, 6)
    # Weights stored as (in, out) so the kernel computes x @ W + b.
    cw1 = trunc(ks[0], (dim, dim)); cb1 = jnp.zeros((1, dim), jnp.float32)
    cw2 = trunc(ks[1], (dim, dim)); cb2 = jnp.zeros((1, dim), jnp.float32)
    cw3 = trunc(ks[2], (dim, 1));   cb3 = jnp.zeros((1, 1), jnp.float32)
    rw1 = trunc(ks[3], (dim, dim)); rb1 = jnp.zeros((1, dim), jnp.float32)
    rw2 = trunc(ks[4], (dim, dim)); rb2 = jnp.zeros((1, dim), jnp.float32)
    rw3 = trunc(ks[5], (dim, 4));   rb3 = jnp.zeros((1, 4), jnp.float32)
    return (cw1, cb1, cw2, cb2, cw3, cb3, rw1, rb1, rw2, rb2, rw3, rb3)


def reference_forward(x, params, H, W):
    """Pure-JAX f32 reference matching the PyTorch forward exactly (erf GELU)."""
    (cw1, cb1, cw2, cb2, cw3, cb3,
     rw1, rb1, rw2, rb2, rw3, rb3) = params
    N, L, C = x.shape
    h = _gelu_erf(x @ cw1 + cb1)
    h = _gelu_erf(h @ cw2 + cb2)
    cls = jax.nn.sigmoid(h @ cw3 + cb3)
    g = _gelu_erf(x @ rw1 + rb1)
    g = _gelu_erf(g @ rw2 + rb2)
    reg = jax.nn.sigmoid(g @ rw3 + rb3)
    class_score = cls.reshape(N, H, W, 1).transpose(0, 3, 1, 2)
    bbox = reg.reshape(N, H, W, 4)
    return {"class_score": class_score, "bbox": bbox}


if __name__ == "__main__":
    key = jax.random.PRNGKey(0)
    k_x, k_p = jax.random.split(key)

    N, H, W, dim = 2, 4, 4, 32   # L = H*W = 16, so T = N*L = 32 tokens
    x = jax.random.normal(k_x, (N, H * W, dim), jnp.float32)
    params = init_params(k_p, dim)

    head = make_mlp_head(params, dim)   # packs weights once
    out = head(x, H, W)
    out = jax.block_until_ready(out)

    ref = reference_forward(x, params, H, W)
    assert out["class_score"].shape == (N, 1, H, W)
    assert out["bbox"].shape == (N, H, W, 4)
    # bf16 matmul operands + bf16 output slab + tanh-GELU vs f32 erf reference
    assert jnp.allclose(out["class_score"], ref["class_score"], atol=2e-2)
    assert jnp.allclose(out["bbox"], ref["bbox"], atol=2e-2)

    print("KERNEL_OK")
</pallas_src>

<mosaic_0001>
module attributes {stable_mosaic.version = 11 : i64} {
  func.func @mlp_head_kernel_fused(%arg0: i32, %arg1: memref<16x128xf32, #tpu.memory_space<vmem>>, %arg2: memref<128x256xbf16, #tpu.memory_space<vmem>>, %arg3: memref<1x256xf32, #tpu.memory_space<vmem>>, %arg4: memref<256x256xbf16, #tpu.memory_space<vmem>>, %arg5: memref<1x256xf32, #tpu.memory_space<vmem>>, %arg6: memref<256x128xbf16, #tpu.memory_space<vmem>>, %arg7: memref<1x128xf32, #tpu.memory_space<vmem>>, %arg8: memref<16x128xbf16, #tpu.memory_space<vmem>>) attributes {dimension_semantics = [#tpu.dimension_semantics<parallel>], iteration_bounds = array<i64: 2>, scalar_prefetch = 0 : i64, scratch_operands = 0 : i64, tpu.core_type = #tpu.core_type<tc>, window_params = [{transform_indices = @transform_0, window_bounds = array<i64: 16, 128>}, {pipeline_mode = #tpu.pipeline_mode<synchronous>, transform_indices = @transform_1, window_bounds = array<i64: 128, 256>}, {pipeline_mode = #tpu.pipeline_mode<synchronous>, transform_indices = @transform_2, window_bounds = array<i64: 1, 256>}, {pipeline_mode = #tpu.pipeline_mode<synchronous>, transform_indices = @transform_3, window_bounds = array<i64: 256, 256>}, {pipeline_mode = #tpu.pipeline_mode<synchronous>, transform_indices = @transform_4, window_bounds = array<i64: 1, 256>}, {pipeline_mode = #tpu.pipeline_mode<synchronous>, transform_indices = @transform_5, window_bounds = array<i64: 256, 128>}, {pipeline_mode = #tpu.pipeline_mode<synchronous>, transform_indices = @transform_6, window_bounds = array<i64: 1, 128>}, {transform_indices = @transform_7, window_bounds = array<i64: 16, 128>}]} {
    %c0 = arith.constant 0 : index
    %c0_0 = arith.constant 0 : index
    %0 = vector.load %arg1[%c0, %c0_0] : memref<16x128xf32, #tpu.memory_space<vmem>>, vector<16x128xf32>
    %1 = arith.truncf %0 : vector<16x128xf32> to vector<16x128xbf16>
    %c0_1 = arith.constant 0 : index
    %c0_2 = arith.constant 0 : index
    %2 = vector.load %arg2[%c0_1, %c0_2] : memref<128x256xbf16, #tpu.memory_space<vmem>>, vector<128x256xbf16>
    %cst = arith.constant dense<0.000000e+00> : vector<16x256xf32>
    %3 = tpu.matmul %1, %2, %cst {dimension_numbers = #tpu.dot_dimension_numbers<[1], [0], [0], [1], [0, 0, 1, 1], [], []>} : vector<16x128xbf16>, vector<128x256xbf16>, vector<16x256xf32> -> vector<16x256xf32>
    %c0_3 = arith.constant 0 : index
    %c0_4 = arith.constant 0 : index
    %4 = vector.load %arg3[%c0_3, %c0_4] : memref<1x256xf32, #tpu.memory_space<vmem>>, vector<1x256xf32>
    %5 = vector.broadcast %4 : vector<1x256xf32> to vector<16x256xf32>
    %6 = arith.addf %3, %5 : vector<16x256xf32>
    %cst_5 = arith.constant 5.000000e-01 : f32
    %7 = vector.broadcast %cst_5 : f32 to vector<16x256xf32>
    %8 = arith.mulf %7, %6 : vector<16x256xf32>
    %cst_6 = arith.constant 4.471500e-02 : f32
    %9 = vector.broadcast %cst_6 : f32 to vector<16x256xf32>
    %10 = arith.mulf %9, %6 : vector<16x256xf32>
    %11 = arith.mulf %10, %6 : vector<16x256xf32>
    %12 = arith.mulf %11, %6 : vector<16x256xf32>
    %13 = arith.addf %6, %12 : vector<16x256xf32>
    %cst_7 = arith.constant 0.797884583 : f32
    %14 = vector.broadcast %cst_7 : f32 to vector<16x256xf32>
    %15 = arith.mulf %14, %13 : vector<16x256xf32>
    %16 = math.tanh %15 : vector<16x256xf32>
    %cst_8 = arith.constant 1.000000e+00 : f32
    %17 = vector.broadcast %cst_8 : f32 to vector<16x256xf32>
    %18 = arith.addf %17, %16 : vector<16x256xf32>
    %19 = arith.mulf %8, %18 : vector<16x256xf32>
    %20 = arith.truncf %19 : vector<16x256xf32> to vector<16x256xbf16>
    %c0_9 = arith.constant 0 : index
    %c0_10 = arith.constant 0 : index
    %21 = vector.load %arg4[%c0_9, %c0_10] : memref<256x256xbf16, #tpu.memory_space<vmem>>, vector<256x256xbf16>
    %cst_11 = arith.constant dense<0.000000e+00> : vector<16x256xf32>
    %22 = tpu.matmul %20, %21, %cst_11 {dimension_numbers = #tpu.dot_dimension_numbers<[1], [0], [0], [1], [0, 0, 1, 1], [], []>} : vector<16x256xbf16>, vector<256x256xbf16>, vector<16x256xf32> -> vector<16x256xf32>
    %c0_12 = arith.constant 0 : index
    %c0_13 = arith.constant 0 : index
    %23 = vector.load %arg5[%c0_12, %c0_13] : memref<1x256xf32, #tpu.memory_space<vmem>>, vector<1x256xf32>
    %24 = vector.broadcast %23 : vector<1x256xf32> to vector<16x256xf32>
    %25 = arith.addf %22, %24 : vector<16x256xf32>
    %cst_14 = arith.constant 5.000000e-01 : f32
    %26 = vector.broadcast %cst_14 : f32 to vector<16x256xf32>
    %27 = arith.mulf %26, %25 : vector<16x256xf32>
    %cst_15 = arith.constant 4.471500e-02 : f32
    %28 = vector.broadcast %cst_15 : f32 to vector<16x256xf32>
    %29 = arith.mulf %28, %25 : vector<16x256xf32>
    %30 = arith.mulf %29, %25 : vector<16x256xf32>
    %31 = arith.mulf %30, %25 : vector<16x256xf32>
    %32 = arith.addf %25, %31 : vector<16x256xf32>
    %cst_16 = arith.constant 0.797884583 : f32
    %33 = vector.broadcast %cst_16 : f32 to vector<16x256xf32>
    %34 = arith.mulf %33, %32 : vector<16x256xf32>
    %35 = math.tanh %34 : vector<16x256xf32>
    %cst_17 = arith.constant 1.000000e+00 : f32
    %36 = vector.broadcast %cst_17 : f32 to vector<16x256xf32>
    %37 = arith.addf %36, %35 : vector<16x256xf32>
    %38 = arith.mulf %27, %37 : vector<16x256xf32>
    %39 = arith.truncf %38 : vector<16x256xf32> to vector<16x256xbf16>
    %c0_18 = arith.constant 0 : index
    %c0_19 = arith.constant 0 : index
    %40 = vector.load %arg6[%c0_18, %c0_19] : memref<256x128xbf16, #tpu.memory_space<vmem>>, vector<256x128xbf16>
    %cst_20 = arith.constant dense<0.000000e+00> : vector<16x128xf32>
    %41 = tpu.matmul %39, %40, %cst_20 {dimension_numbers = #tpu.dot_dimension_numbers<[1], [0], [0], [1], [0, 0, 1, 1], [], []>} : vector<16x256xbf16>, vector<256x128xbf16>, vector<16x128xf32> -> vector<16x128xf32>
    %c0_21 = arith.constant 0 : index
    %c0_22 = arith.constant 0 : index
    %42 = vector.load %arg7[%c0_21, %c0_22] : memref<1x128xf32, #tpu.memory_space<vmem>>, vector<1x128xf32>
    %43 = vector.broadcast %42 : vector<1x128xf32> to vector<16x128xf32>
    %44 = arith.addf %41, %43 : vector<16x128xf32>
    %45 = arith.negf %44 : vector<16x128xf32>
    %46 = math.exp %45 : vector<16x128xf32>
    %cst_23 = arith.constant 1.000000e+00 : f32
    %47 = vector.broadcast %cst_23 : f32 to vector<16x128xf32>
    %48 = arith.addf %47, %46 : vector<16x128xf32>
    %49 = arith.divf %47, %48 : vector<16x128xf32>
    %50 = arith.truncf %49 : vector<16x128xf32> to vector<16x128xbf16>
    %c0_24 = arith.constant 0 : index
    %c0_25 = arith.constant 0 : index
    %51 = vector.load %arg8[%c0_24, %c0_25] : memref<16x128xbf16, #tpu.memory_space<vmem>>, vector<16x128xbf16>
    tpu.vector_store %arg8[%c0_24, %c0_25], %50 {strides = array<i32>} : memref<16x128xbf16, #tpu.memory_space<vmem>>, vector<16x128xbf16>,
    return
  }
  func.func @transform_0(%arg0: i32) -> (i32, i32) {
    %c0_i32 = arith.constant 0 : i32
    %c0_i32_0 = arith.constant 0 : i32
    return %arg0, %c0_i32 : i32, i32
  }
  func.func @transform_1(%arg0: i32) -> (i32, i32) {
    %c0_i32 = arith.constant 0 : i32
    %c0_i32_0 = arith.constant 0 : i32
    %c0_i32_1 = arith.constant 0 : i32
    return %c0_i32, %c0_i32_0 : i32, i32
  }
  func.func @transform_2(%arg0: i32) -> (i32, i32) {
    %c0_i32 = arith.constant 0 : i32
    %c0_i32_0 = arith.constant 0 : i32
    %c0_i32_1 = arith.constant 0 : i32
    return %c0_i32, %c0_i32_0 : i32, i32
  }
  func.func @transform_3(%arg0: i32) -> (i32, i32) {
    %c0_i32 = arith.constant 0 : i32
    %c0_i32_0 = arith.constant 0 : i32
    %c0_i32_1 = arith.constant 0 : i32
    return %c0_i32, %c0_i32_0 : i32, i32
  }
  func.func @transform_4(%arg0: i32) -> (i32, i32) {
    %c0_i32 = arith.constant 0 : i32
    %c0_i32_0 = arith.constant 0 : i32
    %c0_i32_1 = arith.constant 0 : i32
    return %c0_i32, %c0_i32_0 : i32, i32
  }
  func.func @transform_5(%arg0: i32) -> (i32, i32) {
    %c0_i32 = arith.constant 0 : i32
    %c0_i32_0 = arith.constant 0 : i32
    %c0_i32_1 = arith.constant 0 : i32
    return %c0_i32, %c0_i32_0 : i32, i32
  }
  func.func @transform_6(%arg0: i32) -> (i32, i32) {
    %c0_i32 = arith.constant 0 : i32
    %c0_i32_0 = arith.constant 0 : i32
    %c0_i32_1 = arith.constant 0 : i32
    return %c0_i32, %c0_i32_0 : i32, i32
  }
  func.func @transform_7(%arg0: i32) -> (i32, i32) {
    %c0_i32 = arith.constant 0 : i32
    %c0_i32_0 = arith.constant 0 : i32
    return %arg0, %c0_i32 : i32, i32
  }
}

</mosaic_0001>

<llo_original>
// kernel: forward.1
$region0: #{forward.1}
  #allocation0 [shape = 'u32[]', space=smem, size = 0x4, offset = 0x4, fixed_abs, tag = 'smem constant byte address 0x4 - core index']
  #allocation1 [shape = 'u32[72,128]{1,0:T(1,128)}', space=vmem, size = 0x9000, scoped, tag = 'internal scratch']
  %s0 = inlined_call_operand.vmem [shape: f32[32,128], index: 0, kind: input, shape index: {}]
  %s1 = inlined_call_operand.hbm [shape: bf16[128,256], index: 1, kind: input, shape index: {}]
  %s2 = inlined_call_operand.vmem [shape: f32[1,256], index: 2, kind: input, shape index: {}, may-alias: {2,4}]
  %s3 = inlined_call_operand.hbm [shape: bf16[256,256], index: 3, kind: input, shape index: {}]
  %s4 = inlined_call_operand.vmem [shape: f32[1,256], index: 4, kind: input, shape index: {}, may-alias: {2,4}]
  %s5 = inlined_call_operand.hbm [shape: bf16[256,128], index: 5, kind: input, shape index: {}]
  %s6 = inlined_call_operand.vmem [shape: f32[1,128], index: 6, kind: input, shape index: {}]
  %s7 = inlined_call_operand.vmem [shape: bf16[32,128], index: 7, kind: output, shape index: {}]
  %s8 = sld [smem:[#allocation0]]
  $region73: #{forward.1} parent=0
    _
  %s10 = ssub.s32 1, %s8
  %s11 = scalar_select 0, %s10, %s8
  $region1: #{forward.1} parent=0
    #allocation2 [shape = 'u8[65536]{0}', space=vmem, size = 0x10000, scoped, tag = 'input window, operand 1, single buffered']
    #allocation3 [shape = 's32[2]{0}', space=sflag, size = 0x8, scoped, tag = 'scoped memory for forward.1']
    #allocation4 [shape = 'u8[131072]{0}', space=vmem, size = 0x20000, scoped, tag = 'input window, operand 3, single buffered']
    #allocation5 [shape = 's32[1]{0}', space=sflag, size = 0x4, scoped, tag = 'scoped memory for forward.1']
    #allocation6 [shape = 'u8[65536]{0}', space=vmem, size = 0x10000, scoped, tag = 'input window, operand 5, single buffered']
    %12 = vsyncpa [#allocation3], 0
    %13 = vsyncpa [#allocation5], 0
    loop: start=0, step=1, limit=4
    $region2: #{forward.1} parent=1 // loop_pre_header
      _
    $region3: #{forward.1} parent=1 // loop_header
      %s15 = sphi 0, %s19
      %p16 = scmp.ge.s32.totalorder %s15, 4
      %s25 = sphi 0, %s27
      %s28 = sphi 0, %s25
      %s29 = sphi 0, %s28
      %s45 = sphi 0, %s29
      %s49 = sphi 0, %s49
      %s51 = sphi 0, %s49
      %s52 = sphi 0, %s51
      %s66 = sphi 0, %s52
      %s70 = sphi 0, %s70
      %s72 = sphi 0, %s70
      %s73 = sphi 0, %s72
      %s87 = sphi 0, %s73
      %s91 = sphi 0, %s91
      %s93 = sphi 0, %s91
      %s94 = sphi 0, %s93
      %s108 = sphi 0, %s94
      %s112 = sphi 0, %s112
      %s114 = sphi 0, %s112
      %s115 = sphi 0, %s114
      %s129 = sphi 0, %s115
      %s133 = sphi 0, %s133
      %s135 = sphi 0, %s133
      %s136 = sphi 0, %s135
      %s150 = sphi 0, %s136
      %s154 = sphi 0, %s154
      %s156 = sphi 0, %s154
      %s157 = sphi 0, %s156
      %s171 = sphi 0, %s157
      %s177 = sphi 0, %s179
      %s180 = sphi 0, %s177
      %s181 = sphi 0, %s180
      %s197 = sphi 0, %s181
    $region4: #{forward.1} parent=1 // loop_header_branch
      %18 = sbr.rel (%p16) target = $region8
    $region5: #{forward.1} parent=1 // loop_body
      %s20 = ssub.s32 %s15, 1
      %s21 = ssub.s32 %s15, 2
      %s22 = sadd.s32 %s15, 1
      %s23 = ssub.s32 %s15, %s22
      %p24 = scmp.eq.s32.totalorder %s23, 0
      %s26 = sadd.s32 %s25, 1
      %s27 = scalar_select %p24, %s25, %s26
      %p30 = pneg %p24
      %p31 = scmp.eq.s32.totalorder %s15, 1
      %p32 = por %p30, %p31
      %p33 = scmp.ne.s32.totalorder %s25, %s28
      %p34 = scmp.eq.s32.totalorder %s15, 0
      %p35 = por %p33, %p34
      %p36 = scmp.ne.s32.totalorder %s25, %s28
      %p37 = scmp.eq.s32.totalorder %s20, 1
      %p38 = por %p36, %p37
      %p39 = scmp.ne.s32.totalorder %s28, %s29
      %p40 = scmp.eq.s32.totalorder %s20, 0
      %p41 = por %p39, %p40
      %p42 = scmp.ne.s32.totalorder %s28, %s29
      %p43 = scmp.eq.s32.totalorder %s21, 1
      %p44 = por %p42, %p43
      %p46 = scmp.ne.s32.totalorder %s29, %s45
      %p47 = scmp.eq.s32.totalorder %s21, 0
      %p48 = por %p46, %p47
      %s50 = sadd.s32 %s49, 1
      %p53 = scmp.eq.s32.totalorder %s15, 1
      %p54 = scmp.ne.s32.totalorder %s49, %s51
      %p55 = scmp.eq.s32.totalorder %s15, 0
      %p56 = por %p54, %p55
      %p57 = scmp.ne.s32.totalorder %s49, %s51
      %p58 = scmp.eq.s32.totalorder %s20, 1
      %p59 = por %p57, %p58
      %p60 = scmp.ne.s32.totalorder %s51, %s52
      %p61 = scmp.eq.s32.totalorder %s20, 0
      %p62 = por %p60, %p61
      %p63 = scmp.ne.s32.totalorder %s51, %s52
      %p64 = scmp.eq.s32.totalorder %s21, 1
      %p65 = por %p63, %p64
      %p67 = scmp.ne.s32.totalorder %s52, %s66
      %p68 = scmp.eq.s32.totalorder %s21, 0
      %p69 = por %p67, %p68
      %s71 = sadd.s32 %s70, 1
      %p74 = scmp.eq.s32.totalorder %s15, 1
      %p75 = scmp.ne.s32.totalorder %s70, %s72
      %p76 = scmp.eq.s32.totalorder %s15, 0
      %p77 = por %p75, %p76
      %p78 = scmp.ne.s32.totalorder %s70, %s72
      %p79 = scmp.eq.s32.totalorder %s20, 1
      %p80 = por %p78, %p79
      %p81 = scmp.ne.s32.totalorder %s72, %s73
      %p82 = scmp.eq.s32.totalorder %s20, 0
      %p83 = por %p81, %p82
      %p84 = scmp.ne.s32.totalorder %s72, %s73
      %p85 = scmp.eq.s32.totalorder %s21, 1
      %p86 = por %p84, %p85
      %p88 = scmp.ne.s32.totalorder %s73, %s87
      %p89 = scmp.eq.s32.totalorder %s21, 0
      %p90 = por %p88, %p89
      %s92 = sadd.s32 %s91, 1
      %p95 = scmp.eq.s32.totalorder %s15, 1
      %p96 = scmp.ne.s32.totalorder %s91, %s93
      %p97 = scmp.eq.s32.totalorder %s15, 0
      %p98 = por %p96, %p97
      %p99 = scmp.ne.s32.totalorder %s91, %s93
      %p100 = scmp.eq.s32.totalorder %s20, 1
      %p101 = por %p99, %p100
      %p102 = scmp.ne.s32.totalorder %s93, %s94
      %p103 = scmp.eq.s32.totalorder %s20, 0
      %p104 = por %p102, %p103
      %p105 = scmp.ne.s32.totalorder %s93, %s94
      %p106 = scmp.eq.s32.totalorder %s21, 1
      %p107 = por %p105, %p106
      %p109 = scmp.ne.s32.totalorder %s94, %s108
      %p110 = scmp.eq.s32.totalorder %s21, 0
      %p111 = por %p109, %p110
      %s113 = sadd.s32 %s112, 1
      %p116 = scmp.eq.s32.totalorder %s15, 1
      %p117 = scmp.ne.s32.totalorder %s112, %s114
      %p118 = scmp.eq.s32.totalorder %s15, 0
      %p119 = por %p117, %p118
      %p120 = scmp.ne.s32.totalorder %s112, %s114
      %p121 = scmp.eq.s32.totalorder %s20, 1
      %p122 = por %p120, %p121
      %p123 = scmp.ne.s32.totalorder %s114, %s115
      %p124 = scmp.eq.s32.totalorder %s20, 0
      %p125 = por %p123, %p124
      %p126 = scmp.ne.s32.totalorder %s114, %s115
      %p127 = scmp.eq.s32.totalorder %s21, 1
      %p128 = por %p126, %p127
      %p130 = scmp.ne.s32.totalorder %s115, %s129
      %p131 = scmp.eq.s32.totalorder %s21, 0
      %p132 = por %p130, %p131
      %s134 = sadd.s32 %s133, 1
      %p137 = scmp.eq.s32.totalorder %s15, 1
      %p138 = scmp.ne.s32.totalorder %s133, %s135
      %p139 = scmp.eq.s32.totalorder %s15, 0
      %p140 = por %p138, %p139
      %p141 = scmp.ne.s32.totalorder %s133, %s135
      %p142 = scmp.eq.s32.totalorder %s20, 1
      %p143 = por %p141, %p142
      %p144 = scmp.ne.s32.totalorder %s135, %s136
      %p145 = scmp.eq.s32.totalorder %s20, 0
      %p146 = por %p144, %p145
      %p147 = scmp.ne.s32.totalorder %s135, %s136
      %p148 = scmp.eq.s32.totalorder %s21, 1
      %p149 = por %p147, %p148
      %p151 = scmp.ne.s32.totalorder %s136, %s150
      %p152 = scmp.eq.s32.totalorder %s21, 0
      %p153 = por %p151, %p152
      %s155 = sadd.s32 %s154, 1
      %p158 = scmp.eq.s32.totalorder %s15, 1
      %p159 = scmp.ne.s32.totalorder %s154, %s156
      %p160 = scmp.eq.s32.totalorder %s15, 0
      %p161 = por %p159, %p160
      %p162 = scmp.ne.s32.totalorder %s154, %s156
      %p163 = scmp.eq.s32.totalorder %s20, 1
      %p164 = por %p162, %p163
      %p165 = scmp.ne.s32.totalorder %s156, %s157
      %p166 = scmp.eq.s32.totalorder %s20, 0
      %p167 = por %p165, %p166
      %p168 = scmp.ne.s32.totalorder %s156, %s157
      %p169 = scmp.eq.s32.totalorder %s21, 1
      %p170 = por %p168, %p169
      %p172 = scmp.ne.s32.totalorder %s157, %s171
      %p173 = scmp.eq.s32.totalorder %s21, 0
      %p174 = por %p172, %p173
      %s175 = ssub.s32 %s15, %s22
      %p176 = scmp.eq.s32.totalorder %s175, 0
      %s178 = sadd.s32 %s177, 1
      %s179 = scalar_select %p176, %s177, %s178
      %p182 = pneg %p176
      %p183 = scmp.eq.s32.totalorder %s15, 1
      %p184 = por %p182, %p183
      %p185 = scmp.ne.s32.totalorder %s177, %s180
      %p186 = scmp.eq.s32.totalorder %s15, 0
      %p187 = por %p185, %p186
      %p188 = scmp.ne.s32.totalorder %s177, %s180
      %p189 = scmp.eq.s32.totalorder %s20, 1
      %p190 = por %p188, %p189
      %p191 = scmp.ne.s32.totalorder %s180, %s181
      %p192 = scmp.eq.s32.totalorder %s20, 0
      %p193 = por %p191, %p192
      %p194 = scmp.ne.s32.totalorder %s180, %s181
      %p195 = scmp.eq.s32.totalorder %s21, 1
      %p196 = por %p194, %p195
      %p198 = scmp.ne.s32.totalorder %s181, %s197
      %p199 = scmp.eq.s32.totalorder %s21, 0
      %p200 = por %p198, %p199
      %p201 = scmp.le.s32.totalorder 1, %s15
      %p202 = scmp.lt.s32.totalorder %s15, 3
      %p203 = pnand %p201, %p202
      %p204 = pneg %p203
      // Predicated region
      $region9: #{forward.1} parent=5 // pred_check
        _
      $region10: #{forward.1} parent=5 // pred_check_branch
        %206 = sbr.rel (%p203) target = $region12
      $region11: #{forward.1} parent=5 // pred_region
        %s207 = ssub.s32 %s15, 1
        // Predicated region
        $region13: #{forward.1} parent=11 // pred_check
          %p208 = pneg %p62
        $region14: #{forward.1} parent=11 // pred_check_branch
          %210 = sbr.rel (%p208) target = $region16
        $region15: #{forward.1} parent=11 // pred_region
          %212 = vsyncadd [#allocation3], 0
          %s213 = sshll.u32 %s1, 4
          %s214 = int_to_ptr.hbm [resolvable:$true] %s213
          %s215 = sshll.u32 [#allocation2], 4
          %s216 = int_to_ptr.vmem [resolvable:$true] %s215
          %221 = dma.hbm_to_vmem [thread:$0]  %s214, 2048, %s216, [#allocation3], 128, 128, 8
        $region16: #{forward.1} parent=11 // pred_fallthru
          _
        // Predicated region
        $region17: #{forward.1} parent=11 // pred_check
          %p222 = pneg %p83
        $region18: #{forward.1} parent=11 // pred_check_branch
          %224 = sbr.rel (%p222) target = $region20
        $region19: #{forward.1} parent=11 // pred_region
          _
        $region20: #{forward.1} parent=11 // pred_fallthru
          _
        // Predicated region
        $region21: #{forward.1} parent=11 // pred_check
          %p225 = pneg %p104
        $region22: #{forward.1} parent=11 // pred_check_branch
          %227 = sbr.rel (%p225) target = $region24
        $region23: #{forward.1} parent=11 // pred_region
          %229 = vsyncadd [#allocation5], 0
          %s230 = sshll.u32 %s3, 4
          %s231 = int_to_ptr.hbm [resolvable:$true] %s230
          %s232 = sshll.u32 [#allocation4], 4
          %s233 = int_to_ptr.vmem [resolvable:$true] %s232
          %238 = dma.hbm_to_vmem [thread:$0]  %s231, 4096, %s233, [#allocation5], 128, 128, 8
        $region24: #{forward.1} parent=11 // pred_fallthru
          _
        // Predicated region
        $region25: #{forward.1} parent=11 // pred_check
          %p239 = pneg %p125
        $region26: #{forward.1} parent=11 // pred_check_branch
          %241 = sbr.rel (%p239) target = $region28
        $region27: #{forward.1} parent=11 // pred_region
          _
        $region28: #{forward.1} parent=11 // pred_fallthru
          _
        // Predicated region
        $region29: #{forward.1} parent=11 // pred_check
          %p242 = pneg %p146
        $region30: #{forward.1} parent=11 // pred_check_branch
          %244 = sbr.rel (%p242) target = $region32
        $region31: #{forward.1} parent=11 // pred_region
          %246 = vsyncadd [#allocation5], 0
          %s247 = sshll.u32 %s5, 4
          %s248 = int_to_ptr.hbm [resolvable:$true] %s247
          %s249 = sshll.u32 [#allocation6], 4
          %s250 = int_to_ptr.vmem [resolvable:$true] %s249
          %255 = dma.hbm_to_vmem [thread:$0]  %s248, 2048, %s250, [#allocation5], 64, 64, 4
        $region32: #{forward.1} parent=11 // pred_fallthru
          _
        // Predicated region
        $region33: #{forward.1} parent=11 // pred_check
          %p256 = pneg %p167
        $region34: #{forward.1} parent=11 // pred_check_branch
          %258 = sbr.rel (%p256) target = $region36
        $region35: #{forward.1} parent=11 // pred_region
          _
        $region36: #{forward.1} parent=11 // pred_fallthru
          _
      $region12: #{forward.1} parent=5 // pred_fallthru
        _
      %p259 = scmp.lt.s32.totalorder %s15, 2
      // Predicated region
      $region37: #{forward.1} parent=5 // pred_check
        %p260 = pneg %p259
      $region38: #{forward.1} parent=5 // pred_check_branch
        %262 = sbr.rel (%p260) target = $region40
      $region39: #{forward.1} parent=5 // pred_region
        // Predicated region
        $region41: #{forward.1} parent=39 // pred_check
          %p263 = pneg %p35
        $region42: #{forward.1} parent=39 // pred_check_branch
          %265 = sbr.rel (%p263) target = $region44
        $region43: #{forward.1} parent=39 // pred_region
          %s266 = smul.u32 2, %s15
          %p267 = scmp.lt.s32.totalorder %s266, 3
          %s268 = scalar_select %p267, %s266, 3
          %s269 = smul.addr %s268, 8
          %s270 = scalar_lea.vmem %s0, %s269
          %s271 = smul.u32 2, %s15
        $region44: #{forward.1} parent=39 // pred_fallthru
          _
      $region40: #{forward.1} parent=5 // pred_fallthru
        _
      %p272 = scmp.le.s32.totalorder 1, %s15
      %p273 = scmp.lt.s32.totalorder %s15, 3
      %p274 = pnand %p272, %p273
      %p275 = pneg %p274
      // Predicated region
      $region45: #{forward.1} parent=5 // pred_check
        _
      $region46: #{forward.1} parent=5 // pred_check_branch
        %277 = sbr.rel (%p274) target = $region48
      $region47: #{forward.1} parent=5 // pred_region
        %s278 = ssub.s32 %s15, 1
        // Predicated region
        $region49: #{forward.1} parent=47 // pred_check
          %p279 = pneg %p62
        $region50: #{forward.1} parent=47 // pred_check_branch
          %281 = sbr.rel (%p279) target = $region52
        $region51: #{forward.1} parent=47 // pred_region
          %283 = dma.done [#allocation3], 2048
        $region52: #{forward.1} parent=47 // pred_fallthru
          _
        // Predicated region
        $region53: #{forward.1} parent=47 // pred_check
          %p284 = pneg %p104
        $region54: #{forward.1} parent=47 // pred_check_branch
          %286 = sbr.rel (%p284) target = $region56
        $region55: #{forward.1} parent=47 // pred_region
          %288 = dma.done [#allocation5], 4096
        $region56: #{forward.1} parent=47 // pred_fallthru
          _
        // Predicated region
        $region57: #{forward.1} parent=47 // pred_check
          %p289 = pneg %p146
        $region58: #{forward.1} parent=47 // pred_check_branch
          %291 = sbr.rel (%p289) target = $region60
        $region59: #{forward.1} parent=47 // pred_region
          %293 = dma.done [#allocation5], 2048
        $region60: #{forward.1} parent=47 // pred_fallthru
          _
        %s294 = smul.u32 2, %s20
        %p295 = scmp.lt.s32.totalorder %s294, 3
        %s296 = scalar_select %p295, %s294, 3
        %s297 = smul.addr %s296, 8
        %s298 = scalar_lea.vmem %s0, %s297
        %p299 = pneg %p41
        %p300 = pneg %p38
        %p301 = pneg %p62
        %p302 = pneg %p59
        %p303 = pneg %p83
        %p304 = pneg %p80
        %p305 = pneg %p104
        %p306 = pneg %p101
        %p307 = pneg %p125
        %p308 = pneg %p122
        %p309 = pneg %p146
        %p310 = pneg %p143
        %p311 = pneg %p167
        %p312 = pneg %p164
        %p313 = pneg %p193
        %p314 = pneg %p190
        %s315 = smul.u32 2, %s20
        %p316 = scmp.lt.s32.totalorder %s315, 3
        %s317 = scalar_select %p316, %s315, 3
        %s318 = smul.addr %s317, 4
        %s319 = scalar_lea.vmem %s7, %s318
        %s320 = smul.u32 2, %s20
        %p321 = scmp.lt.s32.totalorder %s320, 3
        %s322 = scalar_select %p321, %s320, 3
        %s323 = smul.addr %s322, 8
        %s324 = scalar_lea.vmem %s0, %s323
        %s325 = smul.u32 2, %s20
        %s326 = smul.u32 2, %s20
        %p327 = scmp.lt.s32.totalorder %s326, 3
        %s328 = scalar_select %p327, %s326, 3
        %s329 = smul.addr %s328, 4
        %s330 = scalar_lea.vmem %s7, %s329
        %s331 = smul.u32 2, %s20
        %v332 = vld [vmem:[%s324] sm:$0xff]
        %v333 = vld [vmem:[%s324 + $0x8] sm:$0xff]
        %v334 = vpack.c.bf16 %v333, %v332
        %v335 = vld [vmem:[#allocation2] sm:$0xff]
        %v336 = vld [vmem:[#allocation2 + $0x8] sm:$0xff]
        %v337 = vld [vmem:[#allocation2 + $0x10] sm:$0xff]
        %v338 = vld [vmem:[#allocation2 + $0x18] sm:$0xff]
        %v339 = vld [vmem:[#allocation2 + $0x20] sm:$0xff]
        %v340 = vld [vmem:[#allocation2 + $0x28] sm:$0xff]
        %v341 = vld [vmem:[#allocation2 + $0x30] sm:$0xff]
        %v342 = vld [vmem:[#allocation2 + $0x38] sm:$0xff]
        %v343 = vld [vmem:[#allocation2 + $0x40] sm:$0xff]
        %v344 = vld [vmem:[#allocation2 + $0x48] sm:$0xff]
        %v345 = vld [vmem:[#allocation2 + $0x50] sm:$0xff]
        %v346 = vld [vmem:[#allocation2 + $0x58] sm:$0xff]
        %v347 = vld [vmem:[#allocation2 + $0x60] sm:$0xff]
        %v348 = vld [vmem:[#allocation2 + $0x68] sm:$0xff]
        %v349 = vld [vmem:[#allocation2 + $0x70] sm:$0xff]
        %v350 = vld [vmem:[#allocation2 + $0x78] sm:$0xff]
        %v351 = vld [vmem:[%s2] sm:$0x3]
        %v353 = vperm.slane %v351, 0
        %v354 = vperm.slane %v351, 1
        %v373 = vunpack.c.l.b16 %v335
        %v374 = vunpack.c.h.b16 %v335
        %v375 = vunpack.c.l.b16 %v336
        %v376 = vunpack.c.h.b16 %v336
        %v377 = vunpack.c.l.b16 %v337
        %v378 = vunpack.c.h.b16 %v337
        %v379 = vunpack.c.l.b16 %v338
        %v380 = vunpack.c.h.b16 %v338
        %v381 = vunpack.c.l.b16 %v339
        %v382 = vunpack.c.h.b16 %v339
        %v383 = vunpack.c.l.b16 %v340
        %v384 = vunpack.c.h.b16 %v340
        %v385 = vunpack.c.l.b16 %v341
        %v386 = vunpack.c.h.b16 %v341
        %v387 = vunpack.c.l.b16 %v342
        %v388 = vunpack.c.h.b16 %v342
        %v389 = vunpack.c.l.b16 %v343
        %v390 = vunpack.c.h.b16 %v343
        %v391 = vunpack.c.l.b16 %v344
        %v392 = vunpack.c.h.b16 %v344
        %v393 = vunpack.c.l.b16 %v345
        %v394 = vunpack.c.h.b16 %v345
        %v395 = vunpack.c.l.b16 %v346
        %v396 = vunpack.c.h.b16 %v346
        %v397 = vunpack.c.l.b16 %v347
        %v398 = vunpack.c.h.b16 %v347
        %v399 = vunpack.c.l.b16 %v348
        %v400 = vunpack.c.h.b16 %v348
        %v401 = vunpack.c.l.b16 %v349
        %v402 = vunpack.c.h.b16 %v349
        %v403 = vunpack.c.l.b16 %v350
        %v404 = vunpack.c.h.b16 %v350
        %v405 = vpack.c.b16 %v375, %v373
        %v406 = vpack.c.b16 %v376, %v374
        %v407 = vpack.c.b16 %v379, %v377
        %v408 = vpack.c.b16 %v380, %v378
        %v409 = vpack.c.b16 %v383, %v381
        %v410 = vpack.c.b16 %v384, %v382
        %v411 = vpack.c.b16 %v387, %v385
        %v412 = vpack.c.b16 %v388, %v386
        %v413 = vpack.c.b16 %v391, %v389
        %v414 = vpack.c.b16 %v392, %v390
        %v415 = vpack.c.b16 %v395, %v393
        %v416 = vpack.c.b16 %v396, %v394
        %v417 = vpack.c.b16 %v399, %v397
        %v418 = vpack.c.b16 %v400, %v398
        %v419 = vpack.c.b16 %v403, %v401
        %v420 = vpack.c.b16 %v404, %v402
        %437 = vmatpush.bf16.msra.mxu0 %v419
        %438 = vmatpush.bf16.msra.mxu0 %v417
        %439 = vmatpush.bf16.msra.mxu0 %v415
        %440 = vmatpush.bf16.msra.mxu0 %v413
        %441 = vmatpush.bf16.msra.mxu0 %v411
        %442 = vmatpush.bf16.msra.mxu0 %v409
        %443 = vmatpush.bf16.msra.mxu0 %v407
        %444 = vmatpush.bf16.msra.mxu0 %v405
        %445 = vmatmul.bf16.gmra.mxu0 %v334
        %v446 = vpop.f32.mrf.mxu0
        %v447 = vadd.f32 %v353, %v446
        %v448 = vpop.f32.mrf.mxu0
        %v449 = vadd.f32 %v353, %v448
        %450 = vdwg.mxu0
        %451 = vmatpush.bf16.msra.mxu0 %v420
        %452 = vmatpush.bf16.msra.mxu0 %v418
        %453 = vmatpush.bf16.msra.mxu0 %v416
        %454 = vmatpush.bf16.msra.mxu0 %v414
        %455 = vmatpush.bf16.msra.mxu0 %v412
        %456 = vmatpush.bf16.msra.mxu0 %v410
        %457 = vmatpush.bf16.msra.mxu0 %v408
        %458 = vmatpush.bf16.msra.mxu0 %v406
        %459 = vmatmul.bf16.gmra.mxu0 %v334
        %v460 = vpop.f32.mrf.mxu0
        %v461 = vadd.f32 %v354, %v460
        %v462 = vpop.f32.mrf.mxu0
        %v463 = vadd.f32 %v354, %v462
        %464 = vdwg.mxu0
        %v465 = vmul.f32 %v447, 0.5
        %v466 = vmul.f32 %v461, 0.5
        %v467 = vmul.f32 %v449, 0.5
        %v468 = vmul.f32 %v463, 0.5
        %v469 = vmul.f32 %v447, 0.044715
        %v470 = vmul.f32 %v461, 0.044715
        %v471 = vmul.f32 %v449, 0.044715
        %v472 = vmul.f32 %v463, 0.044715
        %v473 = vmul.f32 %v469, %v447
        %v474 = vmul.f32 %v470, %v461
        %v475 = vmul.f32 %v471, %v449
        %v476 = vmul.f32 %v472, %v463
        %v477 = vmul.f32 %v473, %v447
        %v478 = vmul.f32 %v474, %v461
        %v479 = vmul.f32 %v475, %v449
        %v480 = vmul.f32 %v476, %v463
        %v481 = vadd.f32 %v447, %v477
        %v482 = vadd.f32 %v461, %v478
        %v483 = vadd.f32 %v449, %v479
        %v484 = vadd.f32 %v463, %v480
        %v485 = vmul.f32 %v481, 0.7978846
        %v486 = vmul.f32 %v482, 0.7978846
        %v487 = vmul.f32 %v483, 0.7978846
        %v488 = vmul.f32 %v484, 0.7978846
        %v489 = vtanh.pop %v485
        %v490 = vtanh.pop %v486
        %v491 = vtanh.pop %v487
        %v492 = vtanh.pop %v488
        %v493 = vadd.f32 %v489, 1.0
        %v494 = vadd.f32 %v490, 1.0
        %v495 = vadd.f32 %v491, 1.0
        %v496 = vadd.f32 %v492, 1.0
        %v497 = vmul.f32 %v465, %v493
        %v498 = vmul.f32 %v466, %v494
        %v499 = vmul.f32 %v467, %v495
        %v500 = vmul.f32 %v468, %v496
        %v501 = vpack.c.bf16 %v499, %v497
        %v502 = vpack.c.bf16 %v500, %v498
        %v503 = vld [vmem:[#allocation4] sm:$0xff]
        %v504 = vld [vmem:[#allocation4 + $0x8] sm:$0xff]
        %v505 = vld [vmem:[#allocation4 + $0x10] sm:$0xff]
        %v506 = vld [vmem:[#allocation4 + $0x18] sm:$0xff]
        %v507 = vld [vmem:[#allocation4 + $0x20] sm:$0xff]
        %v508 = vld [vmem:[#allocation4 + $0x28] sm:$0xff]
        %v509 = vld [vmem:[#allocation4 + $0x30] sm:$0xff]
        %v510 = vld [vmem:[#allocation4 + $0x38] sm:$0xff]
        %v511 = vld [vmem:[#allocation4 + $0x40] sm:$0xff]
        %v512 = vld [vmem:[#allocation4 + $0x48] sm:$0xff]
        %v513 = vld [vmem:[#allocation4 + $0x50] sm:$0xff]
        %v514 = vld [vmem:[#allocation4 + $0x58] sm:$0xff]
        %v515 = vld [vmem:[#allocation4 + $0x60] sm:$0xff]
        %v516 = vld [vmem:[#allocation4 + $0x68] sm:$0xff]
        %v517 = vld [vmem:[#allocation4 + $0x70] sm:$0xff]
        %v518 = vld [vmem:[#allocation4 + $0x78] sm:$0xff]
        %v519 = vld [vmem:[#allocation4 + $0x80] sm:$0xff]
        %v520 = vld [vmem:[#allocation4 + $0x88] sm:$0xff]
        %v521 = vld [vmem:[#allocation4 + $0x90] sm:$0xff]
        %v522 = vld [vmem:[#allocation4 + $0x98] sm:$0xff]
        %v523 = vld [vmem:[#allocation4 + $0xa0] sm:$0xff]
        %v524 = vld [vmem:[#allocation4 + $0xa8] sm:$0xff]
        %v525 = vld [vmem:[#allocation4 + $0xb0] sm:$0xff]
        %v526 = vld [vmem:[#allocation4 + $0xb8] sm:$0xff]
        %v527 = vld [vmem:[#allocation4 + $0xc0] sm:$0xff]
        %v528 = vld [vmem:[#allocation4 + $0xc8] sm:$0xff]
        %v529 = vld [vmem:[#allocation4 + $0xd0] sm:$0xff]
        %v530 = vld [vmem:[#allocation4 + $0xd8] sm:$0xff]
        %v531 = vld [vmem:[#allocation4 + $0xe0] sm:$0xff]
        %v532 = vld [vmem:[#allocation4 + $0xe8] sm:$0xff]
        %v533 = vld [vmem:[#allocation4 + $0xf0] sm:$0xff]
        %v534 = vld [vmem:[#allocation4 + $0xf8] sm:$0xff]
        %v535 = vld [vmem:[%s4] sm:$0x3]
        %v537 = vperm.slane %v535, 0
        %v538 = vperm.slane %v535, 1
        %v573 = vunpack.c.l.b16 %v503
        %v574 = vunpack.c.h.b16 %v503
        %v575 = vunpack.c.l.b16 %v504
        %v576 = vunpack.c.h.b16 %v504
        %v577 = vunpack.c.l.b16 %v505
        %v578 = vunpack.c.h.b16 %v505
        %v579 = vunpack.c.l.b16 %v506
        %v580 = vunpack.c.h.b16 %v506
        %v581 = vunpack.c.l.b16 %v507
        %v582 = vunpack.c.h.b16 %v507
        %v583 = vunpack.c.l.b16 %v508
        %v584 = vunpack.c.h.b16 %v508
        %v585 = vunpack.c.l.b16 %v509
        %v586 = vunpack.c.h.b16 %v509
        %v587 = vunpack.c.l.b16 %v510
        %v588 = vunpack.c.h.b16 %v510
        %v589 = vunpack.c.l.b16 %v511
        %v590 = vunpack.c.h.b16 %v511
        %v591 = vunpack.c.l.b16 %v512
        %v592 = vunpack.c.h.b16 %v512
        %v593 = vunpack.c.l.b16 %v513
        %v594 = vunpack.c.h.b16 %v513
        %v595 = vunpack.c.l.b16 %v514
        %v596 = vunpack.c.h.b16 %v514
        %v597 = vunpack.c.l.b16 %v515
        %v598 = vunpack.c.h.b16 %v515
        %v599 = vunpack.c.l.b16 %v516
        %v600 = vunpack.c.h.b16 %v516
        %v601 = vunpack.c.l.b16 %v517
        %v602 = vunpack.c.h.b16 %v517
        %v603 = vunpack.c.l.b16 %v518
        %v604 = vunpack.c.h.b16 %v518
        %v605 = vunpack.c.l.b16 %v519
        %v606 = vunpack.c.h.b16 %v519
        %v607 = vunpack.c.l.b16 %v520
        %v608 = vunpack.c.h.b16 %v520
        %v609 = vunpack.c.l.b16 %v521
        %v610 = vunpack.c.h.b16 %v521
        %v611 = vunpack.c.l.b16 %v522
        %v612 = vunpack.c.h.b16 %v522
        %v613 = vunpack.c.l.b16 %v523
        %v614 = vunpack.c.h.b16 %v523
        %v615 = vunpack.c.l.b16 %v524
        %v616 = vunpack.c.h.b16 %v524
        %v617 = vunpack.c.l.b16 %v525
        %v618 = vunpack.c.h.b16 %v525
        %v619 = vunpack.c.l.b16 %v526
        %v620 = vunpack.c.h.b16 %v526
        %v621 = vunpack.c.l.b16 %v527
        %v622 = vunpack.c.h.b16 %v527
        %v623 = vunpack.c.l.b16 %v528
        %v624 = vunpack.c.h.b16 %v528
        %v625 = vunpack.c.l.b16 %v529
        %v626 = vunpack.c.h.b16 %v529
        %v627 = vunpack.c.l.b16 %v530
        %v628 = vunpack.c.h.b16 %v530
        %v629 = vunpack.c.l.b16 %v531
        %v630 = vunpack.c.h.b16 %v531
        %v631 = vunpack.c.l.b16 %v532
        %v632 = vunpack.c.h.b16 %v532
        %v633 = vunpack.c.l.b16 %v533
        %v634 = vunpack.c.h.b16 %v533
        %v635 = vunpack.c.l.b16 %v534
        %v636 = vunpack.c.h.b16 %v534
        %v637 = vpack.c.b16 %v575, %v573
        %v638 = vpack.c.b16 %v576, %v574
        %v639 = vpack.c.b16 %v579, %v577
        %v640 = vpack.c.b16 %v580, %v578
        %v641 = vpack.c.b16 %v583, %v581
        %v642 = vpack.c.b16 %v584, %v582
        %v643 = vpack.c.b16 %v587, %v585
        %v644 = vpack.c.b16 %v588, %v586
        %v645 = vpack.c.b16 %v591, %v589
        %v646 = vpack.c.b16 %v592, %v590
        %v647 = vpack.c.b16 %v595, %v593
        %v648 = vpack.c.b16 %v596, %v594
        %v649 = vpack.c.b16 %v599, %v597
        %v650 = vpack.c.b16 %v600, %v598
        %v651 = vpack.c.b16 %v603, %v601
        %v652 = vpack.c.b16 %v604, %v602
        %v653 = vpack.c.b16 %v607, %v605
        %v654 = vpack.c.b16 %v608, %v606
        %v655 = vpack.c.b16 %v611, %v609
        %v656 = vpack.c.b16 %v612, %v610
        %v657 = vpack.c.b16 %v615, %v613
        %v658 = vpack.c.b16 %v616, %v614
        %v659 = vpack.c.b16 %v619, %v617
        %v660 = vpack.c.b16 %v620, %v618
        %v661 = vpack.c.b16 %v623, %v621
        %v662 = vpack.c.b16 %v624, %v622
        %v663 = vpack.c.b16 %v627, %v625
        %v664 = vpack.c.b16 %v628, %v626
        %v665 = vpack.c.b16 %v631, %v629
        %v666 = vpack.c.b16 %v632, %v630
        %v667 = vpack.c.b16 %v635, %v633
        %v668 = vpack.c.b16 %v636, %v634
        %701 = vmatpush.bf16.msra.mxu0 %v651
        %702 = vmatpush.bf16.msra.mxu0 %v649
        %703 = vmatpush.bf16.msra.mxu0 %v647
        %704 = vmatpush.bf16.msra.mxu0 %v645
        %705 = vmatpush.bf16.msra.mxu0 %v643
        %706 = vmatpush.bf16.msra.mxu0 %v641
        %707 = vmatpush.bf16.msra.mxu0 %v639
        %708 = vmatpush.bf16.msra.mxu0 %v637
        %709 = vmatmul.bf16.gmra.mxu0 %v501
        %v710 = vpop.f32.mrf.mxu0
        %v711 = vadd.f32 %v537, %v710
        %v712 = vpop.f32.mrf.mxu0
        %v713 = vadd.f32 %v537, %v712
        %714 = vdwg.mxu0
        %715 = vmatpush.bf16.msra.mxu0 %v667
        %716 = vmatpush.bf16.msra.mxu0 %v665
        %717 = vmatpush.bf16.msra.mxu0 %v663
        %718 = vmatpush.bf16.msra.mxu0 %v661
        %719 = vmatpush.bf16.msra.mxu0 %v659
        %720 = vmatpush.bf16.msra.mxu0 %v657
        %721 = vmatpush.bf16.msra.mxu0 %v655
        %722 = vmatpush.bf16.msra.mxu0 %v653
        %723 = vmatmul.bf16.gmra.mxu0 %v502
        %v724 = vpop.f32.mrf.mxu0
        %v725 = vadd.f32 %v711, %v724
        %v726 = vpop.f32.mrf.mxu0
        %v727 = vadd.f32 %v713, %v726
        %728 = vdwg.mxu0
        %729 = vmatpush.bf16.msra.mxu0 %v652
        %730 = vmatpush.bf16.msra.mxu0 %v650
        %731 = vmatpush.bf16.msra.mxu0 %v648
        %732 = vmatpush.bf16.msra.mxu0 %v646
        %733 = vmatpush.bf16.msra.mxu0 %v644
        %734 = vmatpush.bf16.msra.mxu0 %v642
        %735 = vmatpush.bf16.msra.mxu0 %v640
        %736 = vmatpush.bf16.msra.mxu0 %v638
        %737 = vmatmul.bf16.gmra.mxu0 %v501
        %v738 = vpop.f32.mrf.mxu0
        %v739 = vadd.f32 %v538, %v738
        %v740 = vpop.f32.mrf.mxu0
        %v741 = vadd.f32 %v538, %v740
        %742 = vdwg.mxu0
        %743 = vmatpush.bf16.msra.mxu0 %v668
        %744 = vmatpush.bf16.msra.mxu0 %v666
        %745 = vmatpush.bf16.msra.mxu0 %v664
        %746 = vmatpush.bf16.msra.mxu0 %v662
        %747 = vmatpush.bf16.msra.mxu0 %v660
        %748 = vmatpush.bf16.msra.mxu0 %v658
        %749 = vmatpush.bf16.msra.mxu0 %v656
        %750 = vmatpush.bf16.msra.mxu0 %v654
        %751 = vmatmul.bf16.gmra.mxu0 %v502
        %v752 = vpop.f32.mrf.mxu0
        %v753 = vadd.f32 %v739, %v752
        %v754 = vpop.f32.mrf.mxu0
        %v755 = vadd.f32 %v741, %v754
        %756 = vdwg.mxu0
        %v757 = vmul.f32 %v725, 0.5
        %v758 = vmul.f32 %v753, 0.5
        %v759 = vmul.f32 %v727, 0.5
        %v760 = vmul.f32 %v755, 0.5
        %v761 = vmul.f32 %v725, 0.044715
        %v762 = vmul.f32 %v753, 0.044715
        %v763 = vmul.f32 %v727, 0.044715
        %v764 = vmul.f32 %v755, 0.044715
        %v765 = vmul.f32 %v761, %v725
        %v766 = vmul.f32 %v762, %v753
        %v767 = vmul.f32 %v763, %v727
        %v768 = vmul.f32 %v764, %v755
        %v769 = vmul.f32 %v765, %v725
        %v770 = vmul.f32 %v766, %v753
        %v771 = vmul.f32 %v767, %v727
        %v772 = vmul.f32 %v768, %v755
        %v773 = vadd.f32 %v725, %v769
        %v774 = vadd.f32 %v753, %v770
        %v775 = vadd.f32 %v727, %v771
        %v776 = vadd.f32 %v755, %v772
        %v777 = vmul.f32 %v773, 0.7978846
        %v778 = vmul.f32 %v774, 0.7978846
        %v779 = vmul.f32 %v775, 0.7978846
        %v780 = vmul.f32 %v776, 0.7978846
        %v781 = vtanh.pop %v777
        %v782 = vtanh.pop %v778
        %v783 = vtanh.pop %v779
        %v784 = vtanh.pop %v780
        %v785 = vadd.f32 %v781, 1.0
        %v786 = vadd.f32 %v782, 1.0
        %v787 = vadd.f32 %v783, 1.0
        %v788 = vadd.f32 %v784, 1.0
        %v789 = vmul.f32 %v757, %v785
        %v790 = vmul.f32 %v758, %v786
        %v791 = vmul.f32 %v759, %v787
        %v792 = vmul.f32 %v760, %v788
        %v793 = vpack.c.bf16 %v791, %v789
        %v794 = vpack.c.bf16 %v792, %v790
        %v795 = vld [vmem:[#allocation6] sm:$0xf]
        %v796 = vld [vmem:[#allocation6 + $0x4] sm:$0xf]
        %v797 = vld [vmem:[#allocation6 + $0x8] sm:$0xf]
        %v798 = vld [vmem:[#allocation6 + $0xc] sm:$0xf]
        %v799 = vld [vmem:[#allocation6 + $0x10] sm:$0xf]
        %v800 = vld [vmem:[#allocation6 + $0x14] sm:$0xf]
        %v801 = vld [vmem:[#allocation6 + $0x18] sm:$0xf]
        %v802 = vld [vmem:[#allocation6 + $0x1c] sm:$0xf]
        %v803 = vld [vmem:[#allocation6 + $0x20] sm:$0xf]
        %v804 = vld [vmem:[#allocation6 + $0x24] sm:$0xf]
        %v805 = vld [vmem:[#allocation6 + $0x28] sm:$0xf]
        %v806 = vld [vmem:[#allocation6 + $0x2c] sm:$0xf]
        %v807 = vld [vmem:[#allocation6 + $0x30] sm:$0xf]
        %v808 = vld [vmem:[#allocation6 + $0x34] sm:$0xf]
        %v809 = vld [vmem:[#allocation6 + $0x38] sm:$0xf]
        %v810 = vld [vmem:[#allocation6 + $0x3c] sm:$0xf]
        %v811 = vld [vmem:[#allocation6 + $0x40] sm:$0xf]
        %v812 = vld [vmem:[#allocation6 + $0x44] sm:$0xf]
        %v813 = vld [vmem:[#allocation6 + $0x48] sm:$0xf]
        %v814 = vld [vmem:[#allocation6 + $0x4c] sm:$0xf]
        %v815 = vld [vmem:[#allocation6 + $0x50] sm:$0xf]
        %v816 = vld [vmem:[#allocation6 + $0x54] sm:$0xf]
        %v817 = vld [vmem:[#allocation6 + $0x58] sm:$0xf]
        %v818 = vld [vmem:[#allocation6 + $0x5c] sm:$0xf]
        %v819 = vld [vmem:[#allocation6 + $0x60] sm:$0xf]
        %v820 = vld [vmem:[#allocation6 + $0x64] sm:$0xf]
        %v821 = vld [vmem:[#allocation6 + $0x68] sm:$0xf]
        %v822 = vld [vmem:[#allocation6 + $0x6c] sm:$0xf]
        %v823 = vld [vmem:[#allocation6 + $0x70] sm:$0xf]
        %v824 = vld [vmem:[#allocation6 + $0x74] sm:$0xf]
        %v825 = vld [vmem:[#allocation6 + $0x78] sm:$0xf]
        %v826 = vld [vmem:[#allocation6 + $0x7c] sm:$0xf]
        %v827 = vld [vmem:[%s6] sm:$0x1]
        %v829 = vperm.slane %v827, 0
        %v863 = vunpack.c.l.b16 %v795
        %v864 = vunpack.c.l.b16 %v796
        %v865 = vunpack.c.l.b16 %v797
        %v866 = vunpack.c.l.b16 %v798
        %v867 = vunpack.c.l.b16 %v799
        %v868 = vunpack.c.l.b16 %v800
        %v869 = vunpack.c.l.b16 %v801
        %v870 = vunpack.c.l.b16 %v802
        %v871 = vunpack.c.l.b16 %v803
        %v872 = vunpack.c.l.b16 %v804
        %v873 = vunpack.c.l.b16 %v805
        %v874 = vunpack.c.l.b16 %v806
        %v875 = vunpack.c.l.b16 %v807
        %v876 = vunpack.c.l.b16 %v808
        %v877 = vunpack.c.l.b16 %v809
        %v878 = vunpack.c.l.b16 %v810
        %v879 = vunpack.c.l.b16 %v811
        %v880 = vunpack.c.l.b16 %v812
        %v881 = vunpack.c.l.b16 %v813
        %v882 = vunpack.c.l.b16 %v814
        %v883 = vunpack.c.l.b16 %v815
        %v884 = vunpack.c.l.b16 %v816
        %v885 = vunpack.c.l.b16 %v817
        %v886 = vunpack.c.l.b16 %v818
        %v887 = vunpack.c.l.b16 %v819
        %v888 = vunpack.c.l.b16 %v820
        %v889 = vunpack.c.l.b16 %v821
        %v890 = vunpack.c.l.b16 %v822
        %v891 = vunpack.c.l.b16 %v823
        %v892 = vunpack.c.l.b16 %v824
        %v893 = vunpack.c.l.b16 %v825
        %v894 = vunpack.c.l.b16 %v826
        %v895 = vpack.c.b16 %v864, %v863
        %v896 = vpack.c.b16 %v866, %v865
        %v897 = vpack.c.b16 %v868, %v867
        %v898 = vpack.c.b16 %v870, %v869
        %v899 = vpack.c.b16 %v872, %v871
        %v900 = vpack.c.b16 %v874, %v873
        %v901 = vpack.c.b16 %v876, %v875
        %v902 = vpack.c.b16 %v878, %v877
        %v903 = vpack.c.b16 %v880, %v879
        %v904 = vpack.c.b16 %v882, %v881
        %v905 = vpack.c.b16 %v884, %v883
        %v906 = vpack.c.b16 %v886, %v885
        %v907 = vpack.c.b16 %v888, %v887
        %v908 = vpack.c.b16 %v890, %v889
        %v909 = vpack.c.b16 %v892, %v891
        %v910 = vpack.c.b16 %v894, %v893
        %927 = vmatpush.bf16.msra.mxu0 %v902
        %928 = vmatpush.bf16.msra.mxu0 %v901
        %929 = vmatpush.bf16.msra.mxu0 %v900
        %930 = vmatpush.bf16.msra.mxu0 %v899
        %931 = vmatpush.bf16.msra.mxu0 %v898
        %932 = vmatpush.bf16.msra.mxu0 %v897
        %933 = vmatpush.bf16.msra.mxu0 %v896
        %934 = vmatpush.bf16.msra.mxu0 %v895
        %935 = vmatmul.bf16.gmra.mxu0 %v793
        %v936 = vpop.f32.mrf.mxu0
        %v937 = vadd.f32 %v829, %v936
        %v938 = vpop.f32.mrf.mxu0
        %v939 = vadd.f32 %v829, %v938
        %940 = vdwg.mxu0
        %941 = vmatpush.bf16.msra.mxu0 %v910
        %942 = vmatpush.bf16.msra.mxu0 %v909
        %943 = vmatpush.bf16.msra.mxu0 %v908
        %944 = vmatpush.bf16.msra.mxu0 %v907
        %945 = vmatpush.bf16.msra.mxu0 %v906
        %946 = vmatpush.bf16.msra.mxu0 %v905
        %947 = vmatpush.bf16.msra.mxu0 %v904
        %948 = vmatpush.bf16.msra.mxu0 %v903
        %949 = vmatmul.bf16.gmra.mxu0 %v794
        %v950 = vpop.f32.mrf.mxu0
        %v951 = vadd.f32 %v937, %v950
        %v952 = vpop.f32.mrf.mxu0
        %v953 = vadd.f32 %v939, %v952
        %954 = vdwg.mxu0
        %v955 = vxor.u32 %v951, 2147483648
        %v956 = vxor.u32 %v953, 2147483648
        %v957 = vmul.f32 %v955, 1.442695
        %v958 = vpow.pop %v957
        %v959 = vmul.f32 %v956, 1.442695
        %v960 = vpow.pop %v959
        %v961 = vadd.f32 %v958, 1.0
        %v962 = vadd.f32 %v960, 1.0
        %v963 = vrcp.pop %v961
        %v964 = vmul.f32 %v961, %v963
        %v965 = vsub.f32 1.0, %v964
        %v966 = vmul.f32 %v963, %v965
        %v967 = vadd.f32 %v963, %v966
        %vm968 = vweird.f32 %v961
        %vm969 = vweird.f32 %v963
        %vm970 = vmor %vm968, %vm969
        %v971 = vsel %vm970, %v963, %v967
        %v972 = vand.u32 2147483647, %v961
        %vm973 = vcmp.eq.f32.partialorder %v972, 8.507059e+37
        %v974 = vand.u32 %v961, 2147483648
        %v975 = vor.u32 1.1754944e-38, %v974
        %v976 = vsel %vm973, %v975, %v971
        %v977 = vmul.f32 1.0, %v976
        %v978 = vrcp.pop %v962
        %v979 = vmul.f32 %v962, %v978
        %v980 = vsub.f32 1.0, %v979
        %v981 = vmul.f32 %v978, %v980
        %v982 = vadd.f32 %v978, %v981
        %vm983 = vweird.f32 %v962
        %vm984 = vweird.f32 %v978
        %vm985 = vmor %vm983, %vm984
        %v986 = vsel %vm985, %v978, %v982
        %v987 = vand.u32 2147483647, %v962
        %vm988 = vcmp.eq.f32.partialorder %v987, 8.507059e+37
        %v989 = vand.u32 %v962, 2147483648
        %v990 = vor.u32 1.1754944e-38, %v989
        %v991 = vsel %vm988, %v990, %v986
        %v992 = vmul.f32 1.0, %v991
        %v993 = vpack.c.bf16 %v977, %v977
        %v994 = vpack.c.bf16 %v992, %v992
        %995 = vst [vmem:[%s330] sm:$0xf] %v993
        %996 = vst [vmem:[%s330 + $0x4] sm:$0xf] %v994
        %s997 = smul.u32 2, %s20
        %p998 = scmp.lt.s32.totalorder %s997, 3
        %s999 = scalar_select %p998, %s997, 3
        %s1000 = smul.addr %s999, 4
        %s1001 = scalar_lea.vmem %s7, %s1000
        // Predicated region
        $region61: #{forward.1} parent=47 // pred_check
          %p1002 = pneg %p190
        $region62: #{forward.1} parent=47 // pred_check_branch
          %1004 = sbr.rel (%p1002) target = $region64
        $region63: #{forward.1} parent=47 // pred_region
          %s1005 = smul.u32 2, %s20
        $region64: #{forward.1} parent=47 // pred_fallthru
          _
      $region48: #{forward.1} parent=5 // pred_fallthru
        _
      %p1006 = scmp.le.s32.totalorder 2, %s15
      // Predicated region
      $region65: #{forward.1} parent=5 // pred_check
        %p1007 = pneg %p1006
      $region66: #{forward.1} parent=5 // pred_check_branch
        %1009 = sbr.rel (%p1007) target = $region68
      $region67: #{forward.1} parent=5 // pred_region
        %s1010 = ssub.s32 %s15, 2
        // Predicated region
        $region69: #{forward.1} parent=67 // pred_check
          %p1011 = pneg %p196
        $region70: #{forward.1} parent=67 // pred_check_branch
          %1013 = sbr.rel (%p1011) target = $region72
        $region71: #{forward.1} parent=67 // pred_region
          %s1014 = smul.u32 2, %s21
          %p1015 = scmp.lt.s32.totalorder %s1014, 3
          %s1016 = scalar_select %p1015, %s1014, 3
          %s1017 = smul.addr %s1016, 4
          %s1018 = scalar_lea.vmem %s7, %s1017
        $region72: #{forward.1} parent=67 // pred_fallthru
          _
      $region68: #{forward.1} parent=5 // pred_fallthru
        _
    $region6: #{forward.1} parent=1 // loop_footer
      %s19 = sadd.s32 1, %s15
    $region7: #{forward.1} parent=1 // loop_footer_branch
      %14 = sbr.rel target = $region3
    $region8: #{forward.1} parent=1 // loop_exit
      _
    %1019 = vsyncpa [#allocation3], 1
    %s1020 = scalar_lea.sflag [#allocation3], 1
    %1021 = vsyncpa %s1020, 1
    %1022 = vsyncpa [#allocation5], 1

</llo_original>
